<compile_context>
chip_gen: v6e
topology: v6e:2x2x1
jax: 0.10.0
libtpu: 0.0.40
codegen_flags: <defaults>
</compile_context>

<pallas_src>
import functools

import jax
import jax.numpy as jnp
from jax.experimental import pallas as pl
from jax.experimental.pallas import tpu as pltpu


_VMEM_LIMIT_BYTES = 32 * 1024 * 1024    # scoped-VMEM request (safe on v5e/v6e/v7x)
_TILE_BUDGET_BYTES = 16 * 1024 * 1024   # working-set target for one row tile


def _choose_row_tile(num_rows, num_lanes, itemsize):
    """Largest tm with tm % 8 == 0, R % tm == 0 and tile working set in budget."""
    # ~2x-buffered input + output tiles plus ~4 tile-sized elementwise temps.
    per_row_bytes = 8 * num_lanes * itemsize
    tm_max = max(8, _TILE_BUDGET_BYTES // per_row_bytes)
    if num_rows <= tm_max:
        return num_rows                       # single full-dim tile: always legal
    t = (min(tm_max, num_rows) // 8) * 8
    while t >= 8:
        if num_rows % t == 0:
            return t
        t -= 8
    # TODO(synk): pad the row axis for awkward (non multiple-of-8) R instead of
    # falling back to one big tile.
    return num_rows


# ----------------------------------------------------------------------------
# Mode 0 kernel: relu(x) + per-tile partial statistics.
# Each grid step writes its own (8,128) partial block -> no cross-step serial
# dependency, grid axis stays "parallel".  Partials are (tile_sum, tile_M2)
# where M2 is centered about the tile mean (numerically stable); the wrapper
# merges tiles with Chan's parallel-variance formula.
# ----------------------------------------------------------------------------
def _stats_relu_kernel(x_ref, relu_ref, sum_ref, m2_ref):
    x = x_ref[...]
    relu_ref[...] = jnp.maximum(x, 0).astype(relu_ref.dtype)

    xf = x.astype(jnp.float32)
    inv_n = 1.0 / float(xf.size)
    s = jnp.sum(xf)
    mu = s * inv_n
    diff = xf - mu
    m2 = jnp.sum(diff * diff)

    sum_ref[...] = jnp.broadcast_to(s, sum_ref.shape)
    m2_ref[...] = jnp.broadcast_to(m2, m2_ref.shape)


# ----------------------------------------------------------------------------
# Mode 1 kernel: piecewise linear activation as  out = x * K[seg] + C[seg].
#   thresh_ref (SMEM, (N+1,)) : segment thresholds [Bl, Bl+d, ..., Bl+(N-1)d, Br]
#   slope_ref  (SMEM, (N+2,)) : [Kl, K_0..K_{N-1}, Kr]
#   icept_ref  (SMEM, (N+2,)) : matching intercepts
# Shared-compare threshold cascade: one compare per knot drives both selects.
# ----------------------------------------------------------------------------
def _pwla_kernel(thresh_ref, slope_ref, icept_ref, x_ref, o_ref, *, n_thresh):
    x = x_ref[...]
    dt = x.dtype

    m = x >= thresh_ref[0].astype(dt)
    k = jnp.where(m, slope_ref[1].astype(dt), slope_ref[0].astype(dt))
    c = jnp.where(m, icept_ref[1].astype(dt), icept_ref[0].astype(dt))
    for j in range(1, n_thresh):            # static unroll (N+1 knots)
        m = x >= thresh_ref[j].astype(dt)
        k = jnp.where(m, slope_ref[j + 1].astype(dt), k)
        c = jnp.where(m, icept_ref[j + 1].astype(dt), c)

    o_ref[...] = (x * k + c).astype(o_ref.dtype)


# ----------------------------------------------------------------------------
# Module wrapper (deterministic parameter init matching PyTorch __init__).
# ----------------------------------------------------------------------------
class PWLA2dPallas:
    def __init__(self, N=16, momentum=0.9):
        self.N = N
        self.momentum = momentum
        self.Br = jnp.asarray(10.0, jnp.float32)
        self.Bl = jnp.asarray(-10.0, jnp.float32)
        self.Kl = jnp.asarray(0.0, jnp.float32)
        self.Kr = jnp.asarray(1.0, jnp.float32)
        # Yidx = relu(linspace(Bl, Br, N+1))
        self.Yidx = jnp.maximum(
            jnp.linspace(-10.0, 10.0, N + 1, dtype=jnp.float32), 0.0)
        self.running_mean = jnp.zeros((1,), jnp.float32)
        self.running_std = jnp.ones((1,), jnp.float32)

    # Precompute per-segment slope / intercept tables (boundary branches folded
    # in) plus the segment thresholds.  Cheap O(N) wrapper-side work.
    def _build_tables(self):
        N = self.N
        d = (self.Br - self.Bl) / N
        t_int = self.Bl + jnp.arange(N, dtype=jnp.float32) * d        # (N,)
        thresh = jnp.concatenate([t_int, jnp.reshape(self.Br, (1,))])  # (N+1,)
        s_int = (self.Yidx[1:] - self.Yidx[:-1]) / d                   # (N,)
        c_int = self.Yidx[:-1] - t_int * s_int                         # (N,)
        slope = jnp.concatenate([jnp.reshape(self.Kl, (1,)), s_int,
                                 jnp.reshape(self.Kr, (1,))])          # (N+2,)
        icept = jnp.concatenate(
            [jnp.reshape(self.Yidx[0] - self.Bl * self.Kl, (1,)),
             c_int,
             jnp.reshape(self.Yidx[self.N] - self.Br * self.Kr, (1,))])  # (N+2,)
        return thresh, slope, icept

    def __call__(self, x, mode=0):
        B, C, L = x.shape
        R = B * C
        x2 = x.reshape(R, L)
        tm = _choose_row_tile(R, L, jnp.dtype(x.dtype).itemsize)
        assert R % tm == 0, "row tile must divide B*C"
        G = R // tm

        cparams = pltpu.CompilerParams(
            dimension_semantics=("parallel",),
            vmem_limit_bytes=_VMEM_LIMIT_BYTES)

        if mode == 0:
            relu_out, sums, m2s = pl.pallas_call(
                _stats_relu_kernel,
                out_shape=(jax.ShapeDtypeStruct((R, L), x.dtype),
                           jax.ShapeDtypeStruct((G * 8, 128), jnp.float32),
                           jax.ShapeDtypeStruct((G * 8, 128), jnp.float32)),
                grid_spec=pltpu.PrefetchScalarGridSpec(
                    num_scalar_prefetch=0,
                    grid=(G,),
                    in_specs=[pl.BlockSpec((tm, L), lambda i: (i, 0))],
                    out_specs=(pl.BlockSpec((tm, L), lambda i: (i, 0)),
                               pl.BlockSpec((8, 128), lambda i: (i, 0)),
                               pl.BlockSpec((8, 128), lambda i: (i, 0)))),
                compiler_params=cparams,
            )(x2)

            nt = tm * L                      # elements per tile
            n = R * L                        # total elements
            tile_sum = sums[::8, 0]          # (G,)  per-tile sums
            tile_m2 = m2s[::8, 0]            # (G,)  per-tile centered M2
            mean = jnp.sum(tile_sum) / n
            tile_mean = tile_sum / nt
            # Chan parallel-variance merge (numerically stable).
            m2_total = (jnp.sum(tile_m2)
                        + nt * jnp.sum(jnp.square(tile_mean - mean)))
            std = jnp.sqrt(m2_total / (n - 1))      # unbiased, matches torch.std

            # NOTE: eager host-side buffer update mirrors the PyTorch module's
            # running buffers; it is intentionally not jit/pmap-safe.
            self.running_mean = (self.momentum * self.running_mean
                                 + (1.0 - self.momentum) * mean)
            self.running_std = (self.momentum * self.running_std
                                + (1.0 - self.momentum) * std)
            return relu_out.reshape(B, C, L)
        else:
            thresh, slope, icept = self._build_tables()
            out = pl.pallas_call(
                functools.partial(_pwla_kernel, n_thresh=self.N + 1),
                out_shape=jax.ShapeDtypeStruct((R, L), x.dtype),
                grid_spec=pltpu.PrefetchScalarGridSpec(
                    num_scalar_prefetch=0,
                    grid=(G,),
                    in_specs=[pl.BlockSpec(memory_space=pltpu.SMEM),
                              pl.BlockSpec(memory_space=pltpu.SMEM),
                              pl.BlockSpec(memory_space=pltpu.SMEM),
                              pl.BlockSpec((tm, L), lambda i: (i, 0))],
                    out_specs=pl.BlockSpec((tm, L), lambda i: (i, 0))),
                compiler_params=cparams,
            )(thresh, slope, icept, x2)
            return out.reshape(B, C, L)


# ----------------------------------------------------------------------------
# Pure-JAX reference (mirrors the PyTorch forward) for correctness checking.
# ----------------------------------------------------------------------------
def _pwla_ref(x, Bl, Br, Kl, Kr, Yidx, N):
    d = (Br - Bl) / N
    idx_f = jnp.clip(jnp.floor((x - Bl) / d), 0, N - 1)
    idx = idx_f.astype(jnp.int32)
    Bdata = Bl + idx_f * d
    mask_bl = x < Bl
    mask_br = x >= Br
    mask_other = ~(mask_bl | mask_br)
    Ydata = Yidx[idx]
    Kdata = (Yidx[idx + 1] - Yidx[idx]) / d
    return (mask_bl * ((x - Bl) * Kl + Yidx[0])
            + mask_br * ((x - Br) * Kr + Yidx[-1])
            + mask_other * ((x - Bdata) * Kdata + Ydata))


if __name__ == "__main__":
    key = jax.random.PRNGKey(0)
    B, C, L = 2, 4, 128
    x = 6.0 * jax.random.normal(key, (B, C, L), dtype=jnp.float32)
    # force a few values outside [Bl, Br) to exercise the edge branches
    x = x.at[0, 0, 0].set(-12.5).at[0, 0, 1].set(15.0)

    mod = PWLA2dPallas(N=16, momentum=0.9)

    # ---- mode 0 (statistics collection phase): relu + running-stat update --
    y0 = jax.block_until_ready(mod(x, mode=0))
    assert jnp.allclose(y0, jnp.maximum(x, 0.0), atol=1e-6), "mode 0 relu mismatch"
    ref_mean = jnp.mean(x)
    ref_std = jnp.std(x, ddof=1)
    assert jnp.allclose(mod.running_mean, 0.1 * ref_mean, rtol=1e-4, atol=1e-4)
    assert jnp.allclose(mod.running_std, 0.9 + 0.1 * ref_std, rtol=1e-4, atol=1e-4)

    # ---- mode 1 (piecewise-linear activation phase) ------------------------
    y1 = jax.block_until_ready(mod(x, mode=1))
    y1_ref = _pwla_ref(x, mod.Bl, mod.Br, mod.Kl, mod.Kr, mod.Yidx, mod.N)
    assert jnp.allclose(y1, y1_ref, rtol=1e-5, atol=1e-5), "mode 1 mismatch"

    print("KERNEL_OK")
</pallas_src>

<mosaic_0001>
module attributes {stable_mosaic.version = 11 : i64} {
  func.func @_stats_relu_kernel(%arg0: i32, %arg1: memref<8x128xf32, #tpu.memory_space<vmem>>, %arg2: memref<8x128xf32, #tpu.memory_space<vmem>>, %arg3: memref<8x128xf32, #tpu.memory_space<vmem>>, %arg4: memref<8x128xf32, #tpu.memory_space<vmem>>) attributes {dimension_semantics = [#tpu.dimension_semantics<parallel>], iteration_bounds = array<i64: 1>, scalar_prefetch = 0 : i64, scratch_operands = 0 : i64, tpu.core_type = #tpu.core_type<tc>, window_params = [{transform_indices = @transform_0, window_bounds = array<i64: 8, 128>}, {transform_indices = @transform_1, window_bounds = array<i64: 8, 128>}, {transform_indices = @transform_2, window_bounds = array<i64: 8, 128>}, {transform_indices = @transform_3, window_bounds = array<i64: 8, 128>}]} {
    %c0 = arith.constant 0 : index
    %c0_0 = arith.constant 0 : index
    %0 = vector.load %arg1[%c0, %c0_0] : memref<8x128xf32, #tpu.memory_space<vmem>>, vector<8x128xf32>
    %cst = arith.constant 0.000000e+00 : f32
    %1 = vector.broadcast %cst : f32 to vector<8x128xf32>
    %2 = arith.maximumf %0, %1 : vector<8x128xf32>
    %c0_1 = arith.constant 0 : index
    %c0_2 = arith.constant 0 : index
    %3 = vector.load %arg2[%c0_1, %c0_2] : memref<8x128xf32, #tpu.memory_space<vmem>>, vector<8x128xf32>
    tpu.vector_store %arg2[%c0_1, %c0_2], %2 {strides = array<i32>} : memref<8x128xf32, #tpu.memory_space<vmem>>, vector<8x128xf32>,
    %4 = vector.shape_cast %0 : vector<8x128xf32> to vector<1x8x128xf32>
    %cst_3 = arith.constant dense<0.000000e+00> : vector<1xf32>
    %5 = vector.multi_reduction <add>, %4, %cst_3 [1, 2] : vector<1x8x128xf32> to vector<1xf32>
    %6 = vector.shape_cast %5 : vector<1xf32> to vector<1x1x1xf32>
    %7 = vector.extract %6[0, 0, 0] : f32 from vector<1x1x1xf32>
    %cst_4 = arith.constant 9.765625E-4 : f32
    %8 = arith.mulf %7, %cst_4 : f32
    %9 = vector.broadcast %8 : f32 to vector<8x128xf32>
    %10 = arith.subf %0, %9 : vector<8x128xf32>
    %11 = arith.mulf %10, %10 : vector<8x128xf32>
    %12 = vector.shape_cast %11 : vector<8x128xf32> to vector<1x8x128xf32>
    %cst_5 = arith.constant dense<0.000000e+00> : vector<1xf32>
    %13 = vector.multi_reduction <add>, %12, %cst_5 [1, 2] : vector<1x8x128xf32> to vector<1xf32>
    %14 = vector.shape_cast %13 : vector<1xf32> to vector<1x1x1xf32>
    %15 = vector.extract %14[0, 0, 0] : f32 from vector<1x1x1xf32>
    %16 = vector.broadcast %7 : f32 to vector<8x128xf32>
    %c0_6 = arith.constant 0 : index
    %c0_7 = arith.constant 0 : index
    %17 = vector.load %arg3[%c0_6, %c0_7] : memref<8x128xf32, #tpu.memory_space<vmem>>, vector<8x128xf32>
    tpu.vector_store %arg3[%c0_6, %c0_7], %16 {strides = array<i32>} : memref<8x128xf32, #tpu.memory_space<vmem>>, vector<8x128xf32>,
    %18 = vector.broadcast %15 : f32 to vector<8x128xf32>
    %c0_8 = arith.constant 0 : index
    %c0_9 = arith.constant 0 : index
    %19 = vector.load %arg4[%c0_8, %c0_9] : memref<8x128xf32, #tpu.memory_space<vmem>>, vector<8x128xf32>
    tpu.vector_store %arg4[%c0_8, %c0_9], %18 {strides = array<i32>} : memref<8x128xf32, #tpu.memory_space<vmem>>, vector<8x128xf32>,
    return
  }
  func.func @transform_0(%arg0: i32) -> (i32, i32) {
    %c0_i32 = arith.constant 0 : i32
    %c0_i32_0 = arith.constant 0 : i32
    return %arg0, %c0_i32 : i32, i32
  }
  func.func @transform_1(%arg0: i32) -> (i32, i32) {
    %c0_i32 = arith.constant 0 : i32
    %c0_i32_0 = arith.constant 0 : i32
    return %arg0, %c0_i32 : i32, i32
  }
  func.func @transform_2(%arg0: i32) -> (i32, i32) {
    %c0_i32 = arith.constant 0 : i32
    %c0_i32_0 = arith.constant 0 : i32
    return %arg0, %c0_i32 : i32, i32
  }
  func.func @transform_3(%arg0: i32) -> (i32, i32) {
    %c0_i32 = arith.constant 0 : i32
    %c0_i32_0 = arith.constant 0 : i32
    return %arg0, %c0_i32 : i32, i32
  }
}

</mosaic_0001>

<llo_original>
// kernel: tpu_custom_call.1
$region0: #{tpu_custom_call.1}
  #allocation0 [shape = 'u32[]', space=smem, size = 0x4, offset = 0x4, fixed_abs, tag = 'smem constant byte address 0x4 - core index']
  #allocation1 [shape = 'u32[144,128]{1,0:T(1,128)}', space=vmem, size = 0x12000, scoped, tag = 'internal scratch']
  %s0 = inlined_call_operand.hbm [shape: f32[8,128], index: 0, kind: input, shape index: {}]
  %s1 = inlined_call_operand.hbm [shape: f32[8,128], index: 1, kind: output, shape index: {0}]
  %s2 = inlined_call_operand.hbm [shape: f32[8,128], index: 2, kind: output, shape index: {1}]
  %s3 = inlined_call_operand.hbm [shape: f32[8,128], index: 3, kind: output, shape index: {2}]
  %4 = xla_tuple %s1, %s2, %s3
  %s5 = sld [smem:[#allocation0]]
  $region34: #{tpu_custom_call.1} parent=0
    _
  %s7 = ssub.s32 1, %s5
  %s8 = scalar_select 0, %s7, %s5
  $region1: #{tpu_custom_call.1} parent=0
    #allocation2 [shape = 'u8[4096]{0}', space=vmem, size = 0x1000, scoped, tag = 'input window, operand 0, single buffered']
    #allocation3 [shape = 's32[1]{0}', space=sflag, size = 0x4, scoped, tag = 'scoped memory for tpu_custom_call.1']
    #allocation4 [shape = 's32[1]{0}', space=sflag, size = 0x4, scoped, tag = 'scoped memory for tpu_custom_call.1']
    #allocation5 [shape = 'u8[4096]{0}', space=vmem, size = 0x1000, scoped, tag = 'output window, operand 0, single buffered']
    #allocation6 [shape = 'u8[4096]{0}', space=vmem, size = 0x1000, scoped, tag = 'output window, operand 1, single buffered']
    #allocation7 [shape = 's32[1]{0}', space=sflag, size = 0x4, scoped, tag = 'scoped memory for tpu_custom_call.1']
    #allocation8 [shape = 'u8[4096]{0}', space=vmem, size = 0x1000, scoped, tag = 'output window, operand 2, single buffered']
    %9 = vsyncpa [#allocation3], 0
    %10 = vsyncpa [#allocation4], 0
    %11 = vsyncpa [#allocation7], 0
    // Predicated region
    $region2: #{tpu_custom_call.1} parent=1 // pred_check
      _
    $region3: #{tpu_custom_call.1} parent=1 // pred_check_branch
      %13 = sbr.rel (0) target = $region5
    $region4: #{tpu_custom_call.1} parent=1 // pred_region
      %s15 = ssub.s32 128, 128
      %16 = vsyncadd [#allocation3], %s15
      %s18 = sshll.u32 [#allocation2], 4
      %s19 = int_to_ptr.vmem [resolvable:$true] %s18
      %21 = dma.hbm_to_vmem [thread:$0]  %s0, 128, %s19, [#allocation3]
    $region5: #{tpu_custom_call.1} parent=1 // pred_fallthru
      _
    // Predicated region
    $region6: #{tpu_custom_call.1} parent=1 // pred_check
      _
    $region7: #{tpu_custom_call.1} parent=1 // pred_check_branch
      %23 = sbr.rel (0) target = $region9
    $region8: #{tpu_custom_call.1} parent=1 // pred_region
      %24 = dma.done [#allocation3], 128
    $region9: #{tpu_custom_call.1} parent=1 // pred_fallthru
      _
    %v25 = vld [vmem:[#allocation2] sm:$0xff]
    %v26 = vmax.f32 %v25, 0.0
    %27 = vst [vmem:[#allocation5] sm:$0xff] %v26
    %28 = vadd.xlane.f32.xlu0 %v25
    %v29 = vpop.xlane.xlu0 %28
    %v30 = vrot.slane %v29, 4
    %v31 = vadd.f32 %v29, %v30
    %v32 = vrot.slane %v31, 2
    %v33 = vadd.f32 %v31, %v32
    %v34 = vrot.slane %v33, 1
    %v35 = vadd.f32 %v33, %v34
    %s36 = vtos %v35
    %s37 = smul.f32 %s36, 0.0009765625
    %v38 = vstv %s37
    %v39 = vsub.f32 %v25, %v38
    %v40 = vmul.f32 %v39, %v39
    %41 = vadd.xlane.f32.xlu0 %v40
    %v42 = vpop.xlane.xlu0 %41
    %v43 = vrot.slane %v42, 4
    %v44 = vadd.f32 %v42, %v43
    %v45 = vrot.slane %v44, 2
    %v46 = vadd.f32 %v44, %v45
    %v47 = vrot.slane %v46, 1
    %v48 = vadd.f32 %v46, %v47
    %s49 = vtos %v48
    %v50 = vstv %s36
    %51 = vst [vmem:[#allocation6] sm:$0xff] %v50
    %v52 = vstv %s49
    %53 = vst [vmem:[#allocation8] sm:$0xff] %v52
    // Predicated region
    $region10: #{tpu_custom_call.1} parent=1 // pred_check
      _
    $region11: #{tpu_custom_call.1} parent=1 // pred_check_branch
      %55 = sbr.rel (0) target = $region13
    $region12: #{tpu_custom_call.1} parent=1 // pred_region
      %s57 = ssub.s32 128, 128
      %58 = vsyncadd [#allocation4], %s57
      %s60 = sshll.u32 [#allocation5], 4
      %s61 = int_to_ptr.vmem [resolvable:$true] %s60
      %63 = dma.vmem_to_hbm [thread:$0]  %s61, 128, %s1, [#allocation4]
    $region13: #{tpu_custom_call.1} parent=1 // pred_fallthru
      _
    // Predicated region
    $region14: #{tpu_custom_call.1} parent=1 // pred_check
      _
    $region15: #{tpu_custom_call.1} parent=1 // pred_check_branch
      %65 = sbr.rel (0) target = $region17
    $region16: #{tpu_custom_call.1} parent=1 // pred_region
      %s67 = ssub.s32 128, 128
      %68 = vsyncadd [#allocation7], %s67
      %s70 = sshll.u32 [#allocation6], 4
      %s71 = int_to_ptr.vmem [resolvable:$true] %s70
      %73 = dma.vmem_to_hbm [thread:$0]  %s71, 128, %s2, [#allocation7]
    $region17: #{tpu_custom_call.1} parent=1 // pred_fallthru
      _
    // Predicated region
    $region18: #{tpu_custom_call.1} parent=1 // pred_check
      _
    $region19: #{tpu_custom_call.1} parent=1 // pred_check_branch
      %75 = sbr.rel (0) target = $region21
    $region20: #{tpu_custom_call.1} parent=1 // pred_region
      %s77 = ssub.s32 128, 128
      %78 = vsyncadd [#allocation7], %s77
      %s80 = sshll.u32 [#allocation8], 4
      %s81 = int_to_ptr.vmem [resolvable:$true] %s80
      %83 = dma.vmem_to_hbm [thread:$0]  %s81, 128, %s3, [#allocation7]
    $region21: #{tpu_custom_call.1} parent=1 // pred_fallthru
      _
    // Predicated region
    $region22: #{tpu_custom_call.1} parent=1 // pred_check
      _
    $region23: #{tpu_custom_call.1} parent=1 // pred_check_branch
      %85 = sbr.rel (0) target = $region25
    $region24: #{tpu_custom_call.1} parent=1 // pred_region
      %86 = dma.done [#allocation4], 128
    $region25: #{tpu_custom_call.1} parent=1 // pred_fallthru
      _
    // Predicated region
    $region26: #{tpu_custom_call.1} parent=1 // pred_check
      _
    $region27: #{tpu_custom_call.1} parent=1 // pred_check_branch
      %88 = sbr.rel (0) target = $region29
    $region28: #{tpu_custom_call.1} parent=1 // pred_region
      %89 = dma.done [#allocation7], 128
    $region29: #{tpu_custom_call.1} parent=1 // pred_fallthru
      _
    // Predicated region
    $region30: #{tpu_custom_call.1} parent=1 // pred_check
      _
    $region31: #{tpu_custom_call.1} parent=1 // pred_check_branch
      %91 = sbr.rel (0) target = $region33
    $region32: #{tpu_custom_call.1} parent=1 // pred_region
      %92 = dma.done [#allocation7], 128
    $region33: #{tpu_custom_call.1} parent=1 // pred_fallthru
      _
    %93 = vsyncpa [#allocation3], 1
    %94 = vsyncpa [#allocation4], 1
    %95 = vsyncpa [#allocation7], 1

</llo_original>
